<compile_context>
chip_gen: v7x
topology: tpu7x:2x2x1
jax: 0.10.0
libtpu: 0.0.40
codegen_flags: <defaults>
</compile_context>

<pallas_src>
import math

import jax
import jax.numpy as jnp
from jax.experimental import pallas as pl
from jax.experimental.pallas import tpu as pltpu

D_MODEL = 50
D_FF = 200
D_MODEL_PAD = 128   # lane-dense output / x feature dim
D_FF_PAD = 256      # lane-dense hidden dim


def _round_up(n, m):
    return ((n + m - 1) // m) * m


def _ffn_kernel(x_ref, w1_ref, b1_ref, w2_ref, b2_ref, o_ref):
    # x_ref: (TILE_N, 128)  w1_ref: (128, 256)  b1_ref: (1, 256)
    # w2_ref: (256, 128)    b2_ref: (1, 128)    o_ref: (TILE_N, 128)
    x = x_ref[...]
    # fc1 (padded cols of w1/b1 are zero -> h's padded lanes are exactly 0)
    h = jnp.dot(x, w1_ref[...], preferred_element_type=jnp.float32) + b1_ref[...]
    # exact GELU: x * 0.5 * (1 + erf(x / sqrt(2)));  GELU(0) == 0 so padding stays 0
    h = h * 0.5 * (1.0 + jax.lax.erf(h * (1.0 / math.sqrt(2.0))))
    # fc2 (padded rows of w2 are zero, padded output cols are zero+0-bias)
    o = jnp.dot(h, w2_ref[...], preferred_element_type=jnp.float32) + b2_ref[...]
    o_ref[...] = o.astype(o_ref.dtype)


def poswise_ffn(x, w1_t, b1, w2_t, b2, tile_n=512):
    """x: [B, S, D_MODEL]; w1_t: [D_MODEL, D_FF]; b1: [D_FF];
    w2_t: [D_FF, D_MODEL]; b2: [D_MODEL]."""
    B, S, D = x.shape
    assert D == D_MODEL
    N = B * S
    xf = x.reshape(N, D_MODEL)

    # Row tile: multiple of 8 (sublane rule); cap so small inputs use one tile.
    tile_n = min(tile_n, _round_up(N, 8))
    n_pad = _round_up(N, tile_n)

    dt = x.dtype
    # Zero-pad to lane-dense shapes (padding is mathematically inert, see kernel).
    xp = jnp.zeros((n_pad, D_MODEL_PAD), dt).at[:N, :D_MODEL].set(xf)
    w1p = jnp.zeros((D_MODEL_PAD, D_FF_PAD), dt).at[:D_MODEL, :D_FF].set(w1_t)
    b1p = jnp.zeros((1, D_FF_PAD), dt).at[0, :D_FF].set(b1)
    w2p = jnp.zeros((D_FF_PAD, D_MODEL_PAD), dt).at[:D_FF, :D_MODEL].set(w2_t)
    b2p = jnp.zeros((1, D_MODEL_PAD), dt).at[0, :D_MODEL].set(b2)

    grid = (n_pad // tile_n,)

    bytes_per_elem = jnp.dtype(dt).itemsize
    cost = pl.CostEstimate(
        flops=2 * N * (D_MODEL * D_FF + D_FF * D_MODEL),
        transcendentals=N * D_FF,
        bytes_accessed=bytes_per_elem * (
            xp.size + w1p.size + b1p.size + w2p.size + b2p.size
            + n_pad * D_MODEL_PAD
        ),
    )

    out = pl.pallas_call(
        _ffn_kernel,
        out_shape=jax.ShapeDtypeStruct((n_pad, D_MODEL_PAD), dt),
        grid=grid,
        in_specs=[
            pl.BlockSpec((tile_n, D_MODEL_PAD), lambda i: (i, 0)),       # x tile
            pl.BlockSpec((D_MODEL_PAD, D_FF_PAD), lambda i: (0, 0)),     # w1 (resident)
            pl.BlockSpec((1, D_FF_PAD), lambda i: (0, 0)),               # b1 (resident)
            pl.BlockSpec((D_FF_PAD, D_MODEL_PAD), lambda i: (0, 0)),     # w2 (resident)
            pl.BlockSpec((1, D_MODEL_PAD), lambda i: (0, 0)),            # b2 (resident)
        ],
        out_specs=pl.BlockSpec((tile_n, D_MODEL_PAD), lambda i: (i, 0)),
        compiler_params=pltpu.CompilerParams(
            dimension_semantics=("parallel",),        # independent row tiles
            vmem_limit_bytes=32 * 1024 * 1024,        # safe on v7x's 64 MiB VMEM
        ),
        cost_estimate=cost,
    )(xp, w1p, b1p, w2p, b2p)

    return out[:N, :D_MODEL].reshape(B, S, D_MODEL)


def _reference(x, w1_t, b1, w2_t, b2):
    h = jnp.dot(x, w1_t) + b1
    h = h * 0.5 * (1.0 + jax.lax.erf(h / math.sqrt(2.0)))
    return jnp.dot(h, w2_t) + b2


if __name__ == "__main__":
    key = jax.random.PRNGKey(0)
    kx, k1, kb1, k2, kb2 = jax.random.split(key, 5)

    B, S = 2, 8
    x = jax.random.normal(kx, (B, S, D_MODEL), dtype=jnp.float32)

    # Deterministic parameter init (PyTorch nn.Linear-style uniform bounds).
    bound1 = 1.0 / math.sqrt(D_MODEL)
    bound2 = 1.0 / math.sqrt(D_FF)
    # fc1.weight is (200, 50) in torch; store transposed as (50, 200).
    w1_t = jax.random.uniform(k1, (D_MODEL, D_FF), jnp.float32, -bound1, bound1)
    b1 = jax.random.uniform(kb1, (D_FF,), jnp.float32, -bound1, bound1)
    # fc2.weight is (50, 200) in torch; store transposed as (200, 50).
    w2_t = jax.random.uniform(k2, (D_FF, D_MODEL), jnp.float32, -bound2, bound2)
    b2 = jax.random.uniform(kb2, (D_MODEL,), jnp.float32, -bound2, bound2)

    out = poswise_ffn(x, w1_t, b1, w2_t, b2)
    out = jax.block_until_ready(out)

    ref = _reference(x, w1_t, b1, w2_t, b2)
    assert out.shape == (B, S, D_MODEL)
    assert jnp.allclose(out, ref, atol=1e-4, rtol=1e-4)

    print("KERNEL_OK")
</pallas_src>

<mosaic_0001>
module attributes {stable_mosaic.version = 11 : i64} {
  func.func @_ffn_kernel(%arg0: i32, %arg1: memref<16x128xf32, #tpu.memory_space<vmem>>, %arg2: memref<128x256xf32, #tpu.memory_space<vmem>>, %arg3: memref<1x256xf32, #tpu.memory_space<vmem>>, %arg4: memref<256x128xf32, #tpu.memory_space<vmem>>, %arg5: memref<1x128xf32, #tpu.memory_space<vmem>>, %arg6: memref<16x128xf32, #tpu.memory_space<vmem>>) attributes {dimension_semantics = [#tpu.dimension_semantics<parallel>], iteration_bounds = array<i64: 1>, scalar_prefetch = 0 : i64, scratch_operands = 0 : i64, tpu.core_type = #tpu.core_type<tc>, window_params = [{transform_indices = @transform_0, window_bounds = array<i64: 16, 128>}, {pipeline_mode = #tpu.pipeline_mode<synchronous>, transform_indices = @transform_1, window_bounds = array<i64: 128, 256>}, {pipeline_mode = #tpu.pipeline_mode<synchronous>, transform_indices = @transform_2, window_bounds = array<i64: 1, 256>}, {pipeline_mode = #tpu.pipeline_mode<synchronous>, transform_indices = @transform_3, window_bounds = array<i64: 256, 128>}, {pipeline_mode = #tpu.pipeline_mode<synchronous>, transform_indices = @transform_4, window_bounds = array<i64: 1, 128>}, {transform_indices = @transform_5, window_bounds = array<i64: 16, 128>}]} {
    %c0 = arith.constant 0 : index
    %c0_0 = arith.constant 0 : index
    %0 = vector.load %arg1[%c0, %c0_0] : memref<16x128xf32, #tpu.memory_space<vmem>>, vector<16x128xf32>
    %c0_1 = arith.constant 0 : index
    %c0_2 = arith.constant 0 : index
    %1 = vector.load %arg2[%c0_1, %c0_2] : memref<128x256xf32, #tpu.memory_space<vmem>>, vector<128x256xf32>
    %cst = arith.constant dense<0.000000e+00> : vector<16x256xf32>
    %2 = tpu.matmul %0, %1, %cst {dimension_numbers = #tpu.dot_dimension_numbers<[1], [0], [0], [1], [0, 0, 1, 1], [], []>} : vector<16x128xf32>, vector<128x256xf32>, vector<16x256xf32> -> vector<16x256xf32>
    %c0_3 = arith.constant 0 : index
    %c0_4 = arith.constant 0 : index
    %3 = vector.load %arg3[%c0_3, %c0_4] : memref<1x256xf32, #tpu.memory_space<vmem>>, vector<1x256xf32>
    %4 = vector.broadcast %3 : vector<1x256xf32> to vector<16x256xf32>
    %5 = arith.addf %2, %4 : vector<16x256xf32>
    %cst_5 = arith.constant 5.000000e-01 : f32
    %6 = vector.broadcast %cst_5 : f32 to vector<16x256xf32>
    %7 = arith.mulf %5, %6 : vector<16x256xf32>
    %cst_6 = arith.constant 0.707106769 : f32
    %8 = vector.broadcast %cst_6 : f32 to vector<16x256xf32>
    %9 = arith.mulf %5, %8 : vector<16x256xf32>
    %10 = math.erf %9 : vector<16x256xf32>
    %cst_7 = arith.constant 1.000000e+00 : f32
    %11 = vector.broadcast %cst_7 : f32 to vector<16x256xf32>
    %12 = arith.addf %11, %10 : vector<16x256xf32>
    %13 = arith.mulf %7, %12 : vector<16x256xf32>
    %c0_8 = arith.constant 0 : index
    %c0_9 = arith.constant 0 : index
    %14 = vector.load %arg4[%c0_8, %c0_9] : memref<256x128xf32, #tpu.memory_space<vmem>>, vector<256x128xf32>
    %cst_10 = arith.constant dense<0.000000e+00> : vector<16x128xf32>
    %15 = tpu.matmul %13, %14, %cst_10 {dimension_numbers = #tpu.dot_dimension_numbers<[1], [0], [0], [1], [0, 0, 1, 1], [], []>} : vector<16x256xf32>, vector<256x128xf32>, vector<16x128xf32> -> vector<16x128xf32>
    %c0_11 = arith.constant 0 : index
    %c0_12 = arith.constant 0 : index
    %16 = vector.load %arg5[%c0_11, %c0_12] : memref<1x128xf32, #tpu.memory_space<vmem>>, vector<1x128xf32>
    %17 = vector.broadcast %16 : vector<1x128xf32> to vector<16x128xf32>
    %18 = arith.addf %15, %17 : vector<16x128xf32>
    %c0_13 = arith.constant 0 : index
    %c0_14 = arith.constant 0 : index
    %19 = vector.load %arg6[%c0_13, %c0_14] : memref<16x128xf32, #tpu.memory_space<vmem>>, vector<16x128xf32>
    tpu.vector_store %arg6[%c0_13, %c0_14], %18 {strides = array<i32>} : memref<16x128xf32, #tpu.memory_space<vmem>>, vector<16x128xf32>,
    return
  }
  func.func @transform_0(%arg0: i32) -> (i32, i32) {
    %c0_i32 = arith.constant 0 : i32
    %c0_i32_0 = arith.constant 0 : i32
    return %arg0, %c0_i32 : i32, i32
  }
  func.func @transform_1(%arg0: i32) -> (i32, i32) {
    %c0_i32 = arith.constant 0 : i32
    %c0_i32_0 = arith.constant 0 : i32
    %c0_i32_1 = arith.constant 0 : i32
    return %c0_i32, %c0_i32_0 : i32, i32
  }
  func.func @transform_2(%arg0: i32) -> (i32, i32) {
    %c0_i32 = arith.constant 0 : i32
    %c0_i32_0 = arith.constant 0 : i32
    %c0_i32_1 = arith.constant 0 : i32
    return %c0_i32, %c0_i32_0 : i32, i32
  }
  func.func @transform_3(%arg0: i32) -> (i32, i32) {
    %c0_i32 = arith.constant 0 : i32
    %c0_i32_0 = arith.constant 0 : i32
    %c0_i32_1 = arith.constant 0 : i32
    return %c0_i32, %c0_i32_0 : i32, i32
  }
  func.func @transform_4(%arg0: i32) -> (i32, i32) {
    %c0_i32 = arith.constant 0 : i32
    %c0_i32_0 = arith.constant 0 : i32
    %c0_i32_1 = arith.constant 0 : i32
    return %c0_i32, %c0_i32_0 : i32, i32
  }
  func.func @transform_5(%arg0: i32) -> (i32, i32) {
    %c0_i32 = arith.constant 0 : i32
    %c0_i32_0 = arith.constant 0 : i32
    return %arg0, %c0_i32 : i32, i32
  }
}

</mosaic_0001>

<llo_original>
// kernel: tpu_custom_call.1
$region0: #{tpu_custom_call.1}
  #allocation0 [shape = 'u32[]', space=smem, size = 0x4, offset = 0x4, fixed_abs, tag = 'smem constant byte address 0x4 - core index']
  #allocation1 [shape = 'u32[144,128]{1,0:T(1,128)}', space=vmem, size = 0x12000, scoped, tag = 'internal scratch']
  %s0 = inlined_call_operand.hbm [shape: f32[16,128], index: 0, kind: input, shape index: {}]
  %s1 = inlined_call_operand.hbm [shape: f32[128,256], index: 1, kind: input, shape index: {}]
  %s2 = inlined_call_operand.vmem [shape: f32[1,256], index: 2, kind: input, shape index: {}]
  %s3 = inlined_call_operand.hbm [shape: f32[256,128], index: 3, kind: input, shape index: {}]
  %s4 = inlined_call_operand.vmem [shape: f32[1,128], index: 4, kind: input, shape index: {}]
  %s5 = inlined_call_operand.hbm [shape: f32[16,128], index: 5, kind: output, shape index: {}]
  %s6 = sld [smem:[#allocation0]]
  $region42: #{tpu_custom_call.1} parent=0
    _
  %s8 = ssub.s32 1, %s6
  %s9 = scalar_select 0, %s8, %s6
  $region1: #{tpu_custom_call.1} parent=0
    #allocation2 [shape = 'u8[8192]{0}', space=vmem, size = 0x2000, scoped, tag = 'input window, operand 0, single buffered']
    #allocation3 [shape = 's32[1]{0}', space=sflag, size = 0x4, scoped, tag = 'scoped memory for tpu_custom_call.1']
    #allocation4 [shape = 's32[1]{0}', space=sflag, size = 0x4, scoped, tag = 'scoped memory for tpu_custom_call.1']
    #allocation5 [shape = 'u8[131072]{0}', space=vmem, size = 0x20000, scoped, tag = 'input window, operand 1, single buffered']
    #allocation6 [shape = 's32[1]{0}', space=sflag, size = 0x4, scoped, tag = 'scoped memory for tpu_custom_call.1']
    #allocation7 [shape = 'u8[131072]{0}', space=vmem, size = 0x20000, scoped, tag = 'input window, operand 3, single buffered']
    #allocation8 [shape = 'u8[8192]{0}', space=vmem, size = 0x2000, scoped, tag = 'output window, operand 0, single buffered']
    %10 = vsyncpa [#allocation3], 0
    %11 = vsyncpa [#allocation6], 0
    %12 = vsyncpa [#allocation4], 0
    // Predicated region
    $region2: #{tpu_custom_call.1} parent=1 // pred_check
      _
    $region3: #{tpu_custom_call.1} parent=1 // pred_check_branch
      %14 = sbr.rel (0) target = $region5
    $region4: #{tpu_custom_call.1} parent=1 // pred_region
      %s16 = ssub.s32 256, 256
      %17 = vsyncadd [#allocation3], %s16
      %s18 = sshll.u32 [#allocation2], 4
      %s19 = int_to_ptr.vmem [resolvable:$true] %s18
      %24 = dma.hbm_to_vmem [thread:$0]  %s0, 256, %s19, [#allocation3], 128, 128, 8
    $region5: #{tpu_custom_call.1} parent=1 // pred_fallthru
      _
    // Predicated region
    $region6: #{tpu_custom_call.1} parent=1 // pred_check
      _
    $region7: #{tpu_custom_call.1} parent=1 // pred_check_branch
      %26 = sbr.rel (0) target = $region9
    $region8: #{tpu_custom_call.1} parent=1 // pred_region
      %s28 = ssub.s32 4096, 4096
      %29 = vsyncadd [#allocation6], %s28
      %s30 = sshll.u32 [#allocation5], 4
      %s31 = int_to_ptr.vmem [resolvable:$true] %s30
      %36 = dma.hbm_to_vmem [thread:$0]  %s1, 4096, %s31, [#allocation6], 256, 256, 16
    $region9: #{tpu_custom_call.1} parent=1 // pred_fallthru
      _
    // Predicated region
    $region10: #{tpu_custom_call.1} parent=1 // pred_check
      _
    $region11: #{tpu_custom_call.1} parent=1 // pred_check_branch
      %38 = sbr.rel (0) target = $region13
    $region12: #{tpu_custom_call.1} parent=1 // pred_region
      _
    $region13: #{tpu_custom_call.1} parent=1 // pred_fallthru
      _
    // Predicated region
    $region14: #{tpu_custom_call.1} parent=1 // pred_check
      _
    $region15: #{tpu_custom_call.1} parent=1 // pred_check_branch
      %40 = sbr.rel (0) target = $region17
    $region16: #{tpu_custom_call.1} parent=1 // pred_region
      %s42 = ssub.s32 4096, 4096
      %43 = vsyncadd [#allocation6], %s42
      %s44 = sshll.u32 [#allocation7], 4
      %s45 = int_to_ptr.vmem [resolvable:$true] %s44
      %50 = dma.hbm_to_vmem [thread:$0]  %s3, 4096, %s45, [#allocation6], 128, 128, 8
    $region17: #{tpu_custom_call.1} parent=1 // pred_fallthru
      _
    // Predicated region
    $region18: #{tpu_custom_call.1} parent=1 // pred_check
      _
    $region19: #{tpu_custom_call.1} parent=1 // pred_check_branch
      %52 = sbr.rel (0) target = $region21
    $region20: #{tpu_custom_call.1} parent=1 // pred_region
      _
    $region21: #{tpu_custom_call.1} parent=1 // pred_fallthru
      _
    // Predicated region
    $region22: #{tpu_custom_call.1} parent=1 // pred_check
      _
    $region23: #{tpu_custom_call.1} parent=1 // pred_check_branch
      %54 = sbr.rel (0) target = $region25
    $region24: #{tpu_custom_call.1} parent=1 // pred_region
      %55 = dma.done [#allocation3], 256
    $region25: #{tpu_custom_call.1} parent=1 // pred_fallthru
      _
    // Predicated region
    $region26: #{tpu_custom_call.1} parent=1 // pred_check
      _
    $region27: #{tpu_custom_call.1} parent=1 // pred_check_branch
      %57 = sbr.rel (0) target = $region29
    $region28: #{tpu_custom_call.1} parent=1 // pred_region
      %58 = dma.done [#allocation6], 4096
    $region29: #{tpu_custom_call.1} parent=1 // pred_fallthru
      _
    // Predicated region
    $region30: #{tpu_custom_call.1} parent=1 // pred_check
      _
    $region31: #{tpu_custom_call.1} parent=1 // pred_check_branch
      %60 = sbr.rel (0) target = $region33
    $region32: #{tpu_custom_call.1} parent=1 // pred_region
      %61 = dma.done [#allocation6], 4096
    $region33: #{tpu_custom_call.1} parent=1 // pred_fallthru
      _
    %v62 = vld [vmem:[#allocation2] sm:$0xff]
    %v63 = vld [vmem:[#allocation2 + $0x8] sm:$0xff]
    %v64 = vld [vmem:[#allocation5] sm:$0xff]
    %v65 = vld [vmem:[#allocation5 + $0x8] sm:$0xff]
    %v66 = vld [vmem:[#allocation5 + $0x10] sm:$0xff]
    %v67 = vld [vmem:[#allocation5 + $0x18] sm:$0xff]
    %v68 = vld [vmem:[#allocation5 + $0x20] sm:$0xff]
    %v69 = vld [vmem:[#allocation5 + $0x28] sm:$0xff]
    %v70 = vld [vmem:[#allocation5 + $0x30] sm:$0xff]
    %v71 = vld [vmem:[#allocation5 + $0x38] sm:$0xff]
    %v72 = vld [vmem:[#allocation5 + $0x40] sm:$0xff]
    %v73 = vld [vmem:[#allocation5 + $0x48] sm:$0xff]
    %v74 = vld [vmem:[#allocation5 + $0x50] sm:$0xff]
    %v75 = vld [vmem:[#allocation5 + $0x58] sm:$0xff]
    %v76 = vld [vmem:[#allocation5 + $0x60] sm:$0xff]
    %v77 = vld [vmem:[#allocation5 + $0x68] sm:$0xff]
    %v78 = vld [vmem:[#allocation5 + $0x70] sm:$0xff]
    %v79 = vld [vmem:[#allocation5 + $0x78] sm:$0xff]
    %v80 = vld [vmem:[#allocation5 + $0x80] sm:$0xff]
    %v81 = vld [vmem:[#allocation5 + $0x88] sm:$0xff]
    %v82 = vld [vmem:[#allocation5 + $0x90] sm:$0xff]
    %v83 = vld [vmem:[#allocation5 + $0x98] sm:$0xff]
    %v84 = vld [vmem:[#allocation5 + $0xa0] sm:$0xff]
    %v85 = vld [vmem:[#allocation5 + $0xa8] sm:$0xff]
    %v86 = vld [vmem:[#allocation5 + $0xb0] sm:$0xff]
    %v87 = vld [vmem:[#allocation5 + $0xb8] sm:$0xff]
    %v88 = vld [vmem:[#allocation5 + $0xc0] sm:$0xff]
    %v89 = vld [vmem:[#allocation5 + $0xc8] sm:$0xff]
    %v90 = vld [vmem:[#allocation5 + $0xd0] sm:$0xff]
    %v91 = vld [vmem:[#allocation5 + $0xd8] sm:$0xff]
    %v92 = vld [vmem:[#allocation5 + $0xe0] sm:$0xff]
    %v93 = vld [vmem:[#allocation5 + $0xe8] sm:$0xff]
    %v94 = vld [vmem:[#allocation5 + $0xf0] sm:$0xff]
    %v95 = vld [vmem:[#allocation5 + $0xf8] sm:$0xff]
    %v96 = vld [vmem:[%s2] sm:$0x3]
    %v98 = vlaneseq
    %v99 = vshrl.u32 %v98, 7
    %v100 = vsub.s32 0, %v99
    %v101 = vrot.slane %v96, %v100
    %v102 = vlaneseq
    %v103 = vshrl.u32 %v102, 7
    %v104 = vsub.s32 1, %v103
    %v105 = vrot.slane %v96, %v104
    %108 = vmatprep.subr.mxu0 %v65
    %109 = vmatpush1.msra.mxu0 %v64
    %110 = vmatprep.subr.mxu0 %v67
    %111 = vmatpush1.msra.mxu0 %v66
    %112 = vmatprep.subr.mxu0 %v69
    %113 = vmatpush1.msra.mxu0 %v68
    %114 = vmatprep.subr.mxu0 %v71
    %115 = vmatpush1.msra.mxu0 %v70
    %116 = vmatprep.subr.mxu0 %v73
    %117 = vmatpush1.msra.mxu0 %v72
    %118 = vmatprep.subr.mxu0 %v75
    %119 = vmatpush1.msra.mxu0 %v74
    %120 = vmatprep.subr.mxu0 %v77
    %121 = vmatpush1.msra.mxu0 %v76
    %122 = vmatprep.subr.mxu0 %v79
    %123 = vmatpush1.msra.mxu0 %v78
    %124 = vmatprep.subr.mxu0 %v81
    %125 = vmatpush1.msra.mxu0 %v80
    %126 = vmatprep.subr.mxu0 %v83
    %127 = vmatpush1.msra.mxu0 %v82
    %128 = vmatprep.subr.mxu0 %v85
    %129 = vmatpush1.msra.mxu0 %v84
    %130 = vmatprep.subr.mxu0 %v87
    %131 = vmatpush1.msra.mxu0 %v86
    %132 = vmatprep.subr.mxu0 %v89
    %133 = vmatpush1.msra.mxu0 %v88
    %134 = vmatprep.subr.mxu0 %v91
    %135 = vmatpush1.msra.mxu0 %v90
    %136 = vmatprep.subr.mxu0 %v93
    %137 = vmatpush1.msra.mxu0 %v92
    %138 = vmatprep.subr.mxu0 %v95
    %139 = vmatpush1.msra.mxu0 %v94
    %140 = vmatprep.subr.mxu0 0.0
    %141 = vmatpush1.msra.mxu0 0.0
    %142 = vmatprep.subr.mxu0 0.0
    %143 = vmatpush1.msra.mxu0 0.0
    %144 = vmatprep.subr.mxu0 0.0
    %145 = vmatpush1.msra.mxu0 0.0
    %146 = vmatprep.subr.mxu0 0.0
    %147 = vmatpush1.msra.mxu0 0.0
    %148 = vmatprep.subr.mxu0 0.0
    %149 = vmatpush1.msra.mxu0 0.0
    %150 = vmatprep.subr.mxu0 0.0
    %151 = vmatpush1.msra.mxu0 0.0
    %152 = vmatprep.subr.mxu0 0.0
    %153 = vmatpush1.msra.mxu0 0.0
    %154 = vmatprep.subr.mxu0 0.0
    %155 = vmatpush1.msra.mxu0 0.0
    %156 = vmatprep.subr.mxu0 0.0
    %157 = vmatpush1.msra.mxu0 0.0
    %158 = vmatprep.subr.mxu0 0.0
    %159 = vmatpush1.msra.mxu0 0.0
    %160 = vmatprep.subr.mxu0 0.0
    %161 = vmatpush1.msra.mxu0 0.0
    %162 = vmatprep.subr.mxu0 0.0
    %163 = vmatpush1.msra.mxu0 0.0
    %164 = vmatprep.subr.mxu0 0.0
    %165 = vmatpush1.msra.mxu0 0.0
    %166 = vmatprep.subr.mxu0 0.0
    %167 = vmatpush1.msra.mxu0 0.0
    %168 = vmatprep.subr.mxu0 0.0
    %169 = vmatpush1.msra.mxu0 0.0
    %170 = vmatprep.subr.mxu0 0.0
    %171 = vmatpush1.msra.mxu0 0.0
    %172 = vmatprep.mubr.f32.mxu0 0.0
    %173 = vmatmul.mubr.f32.gmra.mrb[0].mxu0 %v62
    %v174 = vpop.f32.mrb[0].mxu0
    %v175 = vadd.f32 %v101, %v174
    %v176 = vpop.f32.mrb[0].mxu0
    %v177 = vadd.f32 %v105, %v176
    %178 = vmatprep.mubr.f32.mxu0 0.0
    %179 = vmatmul.mubr.f32.gmra.mrb[0].mxu0 %v63
    %v180 = vpop.f32.mrb[0].mxu0
    %v181 = vadd.f32 %v101, %v180
    %v182 = vpop.f32.mrb[0].mxu0
    %v183 = vadd.f32 %v105, %v182
    %184 = vdwg.mxu0
    %v185 = vmul.f32 %v175, 0.5
    %v186 = vmul.f32 %v177, 0.5
    %v187 = vmul.f32 %v181, 0.5
    %v188 = vmul.f32 %v183, 0.5
    %v189 = vmul.f32 %v175, 0.70710677
    %v190 = vmul.f32 %v177, 0.70710677
    %v191 = vmul.f32 %v181, 0.70710677
    %v192 = vmul.f32 %v183, 0.70710677
    %v193 = verf.f32.pop %v189
    %v194 = verf.f32.pop %v190
    %v195 = verf.f32.pop %v191
    %v196 = verf.f32.pop %v192
    %v197 = vadd.f32 %v193, 1.0
    %v198 = vadd.f32 %v194, 1.0
    %v199 = vadd.f32 %v195, 1.0
    %v200 = vadd.f32 %v196, 1.0
    %v201 = vmul.f32 %v185, %v197
    %v202 = vmul.f32 %v186, %v198
    %v203 = vmul.f32 %v187, %v199
    %v204 = vmul.f32 %v188, %v200
    %v205 = vld [vmem:[#allocation7] sm:$0xff]
    %v206 = vld [vmem:[#allocation7 + $0x8] sm:$0xff]
    %v207 = vld [vmem:[#allocation7 + $0x10] sm:$0xff]
    %v208 = vld [vmem:[#allocation7 + $0x18] sm:$0xff]
    %v209 = vld [vmem:[#allocation7 + $0x20] sm:$0xff]
    %v210 = vld [vmem:[#allocation7 + $0x28] sm:$0xff]
    %v211 = vld [vmem:[#allocation7 + $0x30] sm:$0xff]
    %v212 = vld [vmem:[#allocation7 + $0x38] sm:$0xff]
    %v213 = vld [vmem:[#allocation7 + $0x40] sm:$0xff]
    %v214 = vld [vmem:[#allocation7 + $0x48] sm:$0xff]
    %v215 = vld [vmem:[#allocation7 + $0x50] sm:$0xff]
    %v216 = vld [vmem:[#allocation7 + $0x58] sm:$0xff]
    %v217 = vld [vmem:[#allocation7 + $0x60] sm:$0xff]
    %v218 = vld [vmem:[#allocation7 + $0x68] sm:$0xff]
    %v219 = vld [vmem:[#allocation7 + $0x70] sm:$0xff]
    %v220 = vld [vmem:[#allocation7 + $0x78] sm:$0xff]
    %v221 = vld [vmem:[#allocation7 + $0x80] sm:$0xff]
    %v222 = vld [vmem:[#allocation7 + $0x88] sm:$0xff]
    %v223 = vld [vmem:[#allocation7 + $0x90] sm:$0xff]
    %v224 = vld [vmem:[#allocation7 + $0x98] sm:$0xff]
    %v225 = vld [vmem:[#allocation7 + $0xa0] sm:$0xff]
    %v226 = vld [vmem:[#allocation7 + $0xa8] sm:$0xff]
    %v227 = vld [vmem:[#allocation7 + $0xb0] sm:$0xff]
    %v228 = vld [vmem:[#allocation7 + $0xb8] sm:$0xff]
    %v229 = vld [vmem:[#allocation7 + $0xc0] sm:$0xff]
    %v230 = vld [vmem:[#allocation7 + $0xc8] sm:$0xff]
    %v231 = vld [vmem:[#allocation7 + $0xd0] sm:$0xff]
    %v232 = vld [vmem:[#allocation7 + $0xd8] sm:$0xff]
    %v233 = vld [vmem:[#allocation7 + $0xe0] sm:$0xff]
    %v234 = vld [vmem:[#allocation7 + $0xe8] sm:$0xff]
    %v235 = vld [vmem:[#allocation7 + $0xf0] sm:$0xff]
    %v236 = vld [vmem:[#allocation7 + $0xf8] sm:$0xff]
    %v237 = vld [vmem:[%s4] sm:$0x1]
    %v239 = vlaneseq
    %v240 = vshrl.u32 %v239, 7
    %v241 = vsub.s32 0, %v240
    %v242 = vrot.slane %v237, %v241
    %244 = vmatprep.subr.mxu0 0.0
    %245 = vmatpush1.msra.mxu0 %v205
    %246 = vmatprep.subr.mxu0 0.0
    %247 = vmatpush1.msra.mxu0 %v206
    %248 = vmatprep.subr.mxu0 0.0
    %249 = vmatpush1.msra.mxu0 %v207
    %250 = vmatprep.subr.mxu0 0.0
    %251 = vmatpush1.msra.mxu0 %v208
    %252 = vmatprep.subr.mxu0 0.0
    %253 = vmatpush1.msra.mxu0 %v209
    %254 = vmatprep.subr.mxu0 0.0
    %255 = vmatpush1.msra.mxu0 %v210
    %256 = vmatprep.subr.mxu0 0.0
    %257 = vmatpush1.msra.mxu0 %v211
    %258 = vmatprep.subr.mxu0 0.0
    %259 = vmatpush1.msra.mxu0 %v212
    %260 = vmatprep.subr.mxu0 0.0
    %261 = vmatpush1.msra.mxu0 %v213
    %262 = vmatprep.subr.mxu0 0.0
    %263 = vmatpush1.msra.mxu0 %v214
    %264 = vmatprep.subr.mxu0 0.0
    %265 = vmatpush1.msra.mxu0 %v215
    %266 = vmatprep.subr.mxu0 0.0
    %267 = vmatpush1.msra.mxu0 %v216
    %268 = vmatprep.subr.mxu0 0.0
    %269 = vmatpush1.msra.mxu0 %v217
    %270 = vmatprep.subr.mxu0 0.0
    %271 = vmatpush1.msra.mxu0 %v218
    %272 = vmatprep.subr.mxu0 0.0
    %273 = vmatpush1.msra.mxu0 %v219
    %274 = vmatprep.subr.mxu0 0.0
    %275 = vmatpush1.msra.mxu0 %v220
    %276 = vmatprep.subr.mxu0 0.0
    %277 = vmatpush1.msra.mxu0 %v221
    %278 = vmatprep.subr.mxu0 0.0
    %279 = vmatpush1.msra.mxu0 %v222
    %280 = vmatprep.subr.mxu0 0.0
    %281 = vmatpush1.msra.mxu0 %v223
    %282 = vmatprep.subr.mxu0 0.0
    %283 = vmatpush1.msra.mxu0 %v224
    %284 = vmatprep.subr.mxu0 0.0
    %285 = vmatpush1.msra.mxu0 %v225
    %286 = vmatprep.subr.mxu0 0.0
    %287 = vmatpush1.msra.mxu0 %v226
    %288 = vmatprep.subr.mxu0 0.0
    %289 = vmatpush1.msra.mxu0 %v227
    %290 = vmatprep.subr.mxu0 0.0
    %291 = vmatpush1.msra.mxu0 %v228
    %292 = vmatprep.subr.mxu0 0.0
    %293 = vmatpush1.msra.mxu0 %v229
    %294 = vmatprep.subr.mxu0 0.0
    %295 = vmatpush1.msra.mxu0 %v230
    %296 = vmatprep.subr.mxu0 0.0
    %297 = vmatpush1.msra.mxu0 %v231
    %298 = vmatprep.subr.mxu0 0.0
    %299 = vmatpush1.msra.mxu0 %v232
    %300 = vmatprep.subr.mxu0 0.0
    %301 = vmatpush1.msra.mxu0 %v233
    %302 = vmatprep.subr.mxu0 0.0
    %303 = vmatpush1.msra.mxu0 %v234
    %304 = vmatprep.subr.mxu0 0.0
    %305 = vmatpush1.msra.mxu0 %v235
    %306 = vmatprep.subr.mxu0 0.0
    %307 = vmatpush1.msra.mxu0 %v236
    %308 = vmatprep.mubr.f32.mxu0 %v202
    %309 = vmatmul.mubr.f32.gmra.mrb[0].mxu0 %v201
    %v310 = vpop.f32.mrb[0].mxu0
    %v311 = vadd.f32 %v242, %v310
    %v312 = vpop.f32.mrb[0].mxu0
    %313 = vmatprep.mubr.f32.mxu0 %v204
    %314 = vmatmul.mubr.f32.gmra.mrb[0].mxu0 %v203
    %v315 = vpop.f32.mrb[0].mxu0
    %v316 = vadd.f32 %v242, %v315
    %v317 = vpop.f32.mrb[0].mxu0
    %318 = vdwg.mxu0
    %319 = vst [vmem:[#allocation8] sm:$0xff] %v311
    %320 = vst [vmem:[#allocation8 + $0x8] sm:$0xff] %v316
    // Predicated region
    $region34: #{tpu_custom_call.1} parent=1 // pred_check
      _
    $region35: #{tpu_custom_call.1} parent=1 // pred_check_branch
      %322 = sbr.rel (0) target = $region37
    $region36: #{tpu_custom_call.1} parent=1 // pred_region
      %s324 = ssub.s32 256, 256
      %325 = vsyncadd [#allocation4], %s324
      %s326 = sshll.u32 [#allocation8], 4
      %s327 = int_to_ptr.vmem [resolvable:$true] %s326
      %332 = dma.vmem_to_hbm [thread:$0]  %s327, 256, %s5, [#allocation4], 128, 128, 8
    $region37: #{tpu_custom_call.1} parent=1 // pred_fallthru
      _
    // Predicated region
    $region38: #{tpu_custom_call.1} parent=1 // pred_check
      _
    $region39: #{tpu_custom_call.1} parent=1 // pred_check_branch
      %334 = sbr.rel (0) target = $region41
    $region40: #{tpu_custom_call.1} parent=1 // pred_region
      %335 = dma.done [#allocation4], 256
    $region41: #{tpu_custom_call.1} parent=1 // pred_fallthru
      _
    %336 = vsyncpa [#allocation3], 1
    %337 = vsyncpa [#allocation6], 1
    %338 = vsyncpa [#allocation4], 1

</llo_original>
